<compile_context>
chip_gen: v7x
topology: tpu7x:2x2x1
jax: 0.10.0
libtpu: 0.0.40
codegen_flags: <defaults>
</compile_context>

<pallas_src>
import jax
import jax.numpy as jnp
from jax.experimental import pallas as pl
from jax.experimental.pallas import tpu as pltpu


def _simple_gcn_fused_kernel(at_ref, xt_ref, w1t_ref, b1_ref, w2t_ref, b2_ref,
                             w3t_ref, b3_ref, o_ref):
    at = at_ref[...]  # (N, N) = A_norm^T, VMEM-resident for all three layers

    # ---- conv1 + ReLU:  h1^T = relu(W1^T (X^T A^T) + b1) -------------------
    agg = jnp.dot(xt_ref[...], at, preferred_element_type=jnp.float32)      # (H, N)
    h = jnp.dot(w1t_ref[...], agg, preferred_element_type=jnp.float32)      # (H, N)
    h = jnp.maximum(h + b1_ref[...], 0.0)

    # ---- conv2 + ReLU -------------------------------------------------------
    agg = jnp.dot(h, at, preferred_element_type=jnp.float32)                # (H, N)
    h = jnp.dot(w2t_ref[...], agg, preferred_element_type=jnp.float32)      # (H, N)
    h = jnp.maximum(h + b2_ref[...], 0.0)

    # ---- conv3 (f_out = 1): transform FIRST, then aggregate ----------------
    # (W3^T h2^T) is (1, N), so the N^2 contraction uses a 1-row operand
    # (the A @ (X @ W) reorder) and the output is a lane-dense row.
    z = jnp.dot(w3t_ref[...], h, preferred_element_type=jnp.float32)        # (1, N)
    out = jnp.dot(z, at, preferred_element_type=jnp.float32) + b3_ref[...]  # (1, N)
    o_ref[...] = out.astype(o_ref.dtype)


def _full_spec(shape):
    # Whole array as a single VMEM block (block shape == full array dims).
    return pl.BlockSpec(shape, lambda: (0,) * len(shape))


def simple_gcn_forward(a_norm, embed, params):
    """Forward pass of SimpleGCN.

    x = embed(g.nodes())            -> (N, 32)  (all nodes => full embedding table)
    x = relu(conv1(g, x))           -> (N, 32)
    x = relu(conv2(g, x))           -> (N, 32)
    x = conv3(g, x).squeeze(-1)     -> (N,)
    """
    n, h = embed.shape
    out_row = pl.pallas_call(
        _simple_gcn_fused_kernel,
        out_shape=jax.ShapeDtypeStruct((1, n), jnp.float32),
        in_specs=[
            _full_spec((n, n)),  # A_norm^T
            _full_spec((h, n)),  # X^T
            _full_spec((h, h)),  # W1^T
            _full_spec((h, 1)),  # b1 (column, broadcasts over nodes/lanes)
            _full_spec((h, h)),  # W2^T
            _full_spec((h, 1)),  # b2
            _full_spec((1, h)),  # W3^T
            _full_spec((1, 1)),  # b3
        ],
        out_specs=_full_spec((1, n)),
    )(
        a_norm.T,
        embed.T,
        params["w1"].T, params["b1"].reshape(h, 1),
        params["w2"].T, params["b2"].reshape(h, 1),
        params["w3"].T, params["b3"].reshape(1, 1),
    )
    return out_row[0]  # (N,)


def make_graph(num_nodes):
    """Deterministic symmetric graph (ring + a few chords), dense normalized adjacency."""
    idx = jnp.arange(num_nodes)
    a = jnp.zeros((num_nodes, num_nodes), jnp.float32)
    # ring edges (undirected)
    a = a.at[idx, (idx + 1) % num_nodes].set(1.0)
    a = a.at[(idx + 1) % num_nodes, idx].set(1.0)
    # a few extra chords
    a = a.at[idx, (idx + 7) % num_nodes].set(1.0)
    a = a.at[(idx + 7) % num_nodes, idx].set(1.0)
    deg = a.sum(axis=1)
    d_inv_sqrt = 1.0 / jnp.sqrt(deg)
    a_norm = d_inv_sqrt[:, None] * a * d_inv_sqrt[None, :]
    return a_norm


def init_params(key, num_nodes, hidden):
    k_emb, k1, k2, k3 = jax.random.split(key, 4)

    def xavier(k, fan_in, fan_out):
        limit = jnp.sqrt(6.0 / (fan_in + fan_out))
        return jax.random.uniform(k, (fan_in, fan_out), jnp.float32, -limit, limit)

    # nn.init.uniform_(embed, -0.001, 0.001)
    embed = jax.random.uniform(k_emb, (num_nodes, hidden), jnp.float32, -0.001, 0.001)
    params = {
        "w1": xavier(k1, hidden, hidden), "b1": jnp.zeros((hidden,), jnp.float32),
        "w2": xavier(k2, hidden, hidden), "b2": jnp.zeros((hidden,), jnp.float32),
        "w3": xavier(k3, hidden, 1),      "b3": jnp.zeros((1,), jnp.float32),
    }
    return embed, params


if __name__ == "__main__":
    num_nodes = 64
    hidden = 32

    key = jax.random.PRNGKey(0)
    embed, params = init_params(key, num_nodes, hidden)
    a_norm = make_graph(num_nodes)

    out = jax.jit(simple_gcn_forward)(a_norm, embed, params)
    out = jax.block_until_ready(out)

    # pure-JAX reference check
    def ref(a, x, p):
        x = jnp.maximum(a @ x @ p["w1"] + p["b1"], 0.0)
        x = jnp.maximum(a @ x @ p["w2"] + p["b2"], 0.0)
        return jnp.squeeze(a @ x @ p["w3"] + p["b3"], -1)

    expected = ref(a_norm, embed, params)
    assert out.shape == (num_nodes,)
    assert jnp.allclose(out, expected, atol=1e-5, rtol=1e-5)

    print("KERNEL_OK")
</pallas_src>

<mosaic_0001>
module attributes {stable_mosaic.version = 11 : i64} {
  func.func @_simple_gcn_fused_kernel(%arg0: memref<64x64xf32, #tpu.memory_space<vmem>>, %arg1: memref<32x64xf32, #tpu.memory_space<vmem>>, %arg2: memref<32x32xf32, #tpu.memory_space<vmem>>, %arg3: memref<32x1xf32, #tpu.memory_space<vmem>>, %arg4: memref<32x32xf32, #tpu.memory_space<vmem>>, %arg5: memref<32x1xf32, #tpu.memory_space<vmem>>, %arg6: memref<1x32xf32, #tpu.memory_space<vmem>>, %arg7: memref<1x1xf32, #tpu.memory_space<vmem>>, %arg8: memref<1x64xf32, #tpu.memory_space<vmem>>) attributes {dimension_semantics = [], scalar_prefetch = 0 : i64, scratch_operands = 0 : i64, tpu.core_type = #tpu.core_type<tc>} {
    %c0 = arith.constant 0 : index
    %c0_0 = arith.constant 0 : index
    %0 = vector.load %arg0[%c0, %c0_0] : memref<64x64xf32, #tpu.memory_space<vmem>>, vector<64x64xf32>
    %c0_1 = arith.constant 0 : index
    %c0_2 = arith.constant 0 : index
    %1 = vector.load %arg1[%c0_1, %c0_2] : memref<32x64xf32, #tpu.memory_space<vmem>>, vector<32x64xf32>
    %cst = arith.constant dense<0.000000e+00> : vector<32x64xf32>
    %2 = tpu.matmul %1, %0, %cst {dimension_numbers = #tpu.dot_dimension_numbers<[1], [0], [0], [1], [0, 0, 1, 1], [], []>} : vector<32x64xf32>, vector<64x64xf32>, vector<32x64xf32> -> vector<32x64xf32>
    %c0_3 = arith.constant 0 : index
    %c0_4 = arith.constant 0 : index
    %3 = vector.load %arg2[%c0_3, %c0_4] : memref<32x32xf32, #tpu.memory_space<vmem>>, vector<32x32xf32>
    %cst_5 = arith.constant dense<0.000000e+00> : vector<32x64xf32>
    %4 = tpu.matmul %3, %2, %cst_5 {dimension_numbers = #tpu.dot_dimension_numbers<[1], [0], [0], [1], [0, 0, 1, 1], [], []>} : vector<32x32xf32>, vector<32x64xf32>, vector<32x64xf32> -> vector<32x64xf32>
    %c0_6 = arith.constant 0 : index
    %c0_7 = arith.constant 0 : index
    %5 = vector.load %arg3[%c0_6, %c0_7] : memref<32x1xf32, #tpu.memory_space<vmem>>, vector<32x1xf32>
    %6 = vector.broadcast %5 : vector<32x1xf32> to vector<32x64xf32>
    %7 = arith.addf %4, %6 : vector<32x64xf32>
    %cst_8 = arith.constant 0.000000e+00 : f32
    %8 = vector.broadcast %cst_8 : f32 to vector<32x64xf32>
    %9 = arith.maximumf %7, %8 : vector<32x64xf32>
    %cst_9 = arith.constant dense<0.000000e+00> : vector<32x64xf32>
    %10 = tpu.matmul %9, %0, %cst_9 {dimension_numbers = #tpu.dot_dimension_numbers<[1], [0], [0], [1], [0, 0, 1, 1], [], []>} : vector<32x64xf32>, vector<64x64xf32>, vector<32x64xf32> -> vector<32x64xf32>
    %c0_10 = arith.constant 0 : index
    %c0_11 = arith.constant 0 : index
    %11 = vector.load %arg4[%c0_10, %c0_11] : memref<32x32xf32, #tpu.memory_space<vmem>>, vector<32x32xf32>
    %cst_12 = arith.constant dense<0.000000e+00> : vector<32x64xf32>
    %12 = tpu.matmul %11, %10, %cst_12 {dimension_numbers = #tpu.dot_dimension_numbers<[1], [0], [0], [1], [0, 0, 1, 1], [], []>} : vector<32x32xf32>, vector<32x64xf32>, vector<32x64xf32> -> vector<32x64xf32>
    %c0_13 = arith.constant 0 : index
    %c0_14 = arith.constant 0 : index
    %13 = vector.load %arg5[%c0_13, %c0_14] : memref<32x1xf32, #tpu.memory_space<vmem>>, vector<32x1xf32>
    %14 = vector.broadcast %13 : vector<32x1xf32> to vector<32x64xf32>
    %15 = arith.addf %12, %14 : vector<32x64xf32>
    %cst_15 = arith.constant 0.000000e+00 : f32
    %16 = vector.broadcast %cst_15 : f32 to vector<32x64xf32>
    %17 = arith.maximumf %15, %16 : vector<32x64xf32>
    %c0_16 = arith.constant 0 : index
    %c0_17 = arith.constant 0 : index
    %18 = vector.load %arg6[%c0_16, %c0_17] : memref<1x32xf32, #tpu.memory_space<vmem>>, vector<1x32xf32>
    %cst_18 = arith.constant dense<0.000000e+00> : vector<1x64xf32>
    %19 = tpu.matmul %18, %17, %cst_18 {dimension_numbers = #tpu.dot_dimension_numbers<[1], [0], [0], [1], [0, 0, 1, 1], [], []>} : vector<1x32xf32>, vector<32x64xf32>, vector<1x64xf32> -> vector<1x64xf32>
    %cst_19 = arith.constant dense<0.000000e+00> : vector<1x64xf32>
    %20 = tpu.matmul %19, %0, %cst_19 {dimension_numbers = #tpu.dot_dimension_numbers<[1], [0], [0], [1], [0, 0, 1, 1], [], []>} : vector<1x64xf32>, vector<64x64xf32>, vector<1x64xf32> -> vector<1x64xf32>
    %c0_20 = arith.constant 0 : index
    %c0_21 = arith.constant 0 : index
    %21 = vector.load %arg7[%c0_20, %c0_21] : memref<1x1xf32, #tpu.memory_space<vmem>>, vector<1x1xf32>
    %22 = vector.broadcast %21 : vector<1x1xf32> to vector<1x64xf32>
    %23 = arith.addf %20, %22 : vector<1x64xf32>
    %c0_22 = arith.constant 0 : index
    %c0_23 = arith.constant 0 : index
    %24 = vector.load %arg8[%c0_22, %c0_23] : memref<1x64xf32, #tpu.memory_space<vmem>>, vector<1x64xf32>
    tpu.vector_store %arg8[%c0_22, %c0_23], %23 {strides = array<i32>} : memref<1x64xf32, #tpu.memory_space<vmem>>, vector<1x64xf32>,
    return
  }
}

</mosaic_0001>

<llo_original>
// kernel: simple_gcn_forward.1
$region0: #{simple_gcn_forward.1}
  #allocation0 [shape = 'u32[]', space=smem, size = 0x4, offset = 0x4, fixed_abs, tag = 'smem constant byte address 0x4 - core index']
  #allocation1 [shape = 'u32[144,128]{1,0:T(1,128)}', space=vmem, size = 0x12000, scoped, tag = 'internal scratch']
  #allocation2 [shape = 'f32[1,1]{1,0:T(1,128)S(1)}', space=vmem, size = 0x200, scoped, tag = 'scoped memory for simple_gcn_forward.1']
  %s0 = inlined_call_operand.vmem [shape: f32[64,64], index: 0, kind: input, shape index: {}]
  %s1 = inlined_call_operand.vmem [shape: f32[32,64], index: 1, kind: input, shape index: {}]
  %s2 = inlined_call_operand.vmem [shape: f32[32,32], index: 2, kind: input, shape index: {}]
  %s3 = inlined_call_operand.vmem [shape: f32[32,1], index: 3, kind: input, shape index: {}]
  %s4 = inlined_call_operand.vmem [shape: f32[32,32], index: 4, kind: input, shape index: {}]
  %s5 = inlined_call_operand.vmem [shape: f32[32,1], index: 5, kind: input, shape index: {}]
  %s6 = inlined_call_operand.vmem [shape: f32[1,32], index: 6, kind: input, shape index: {}]
  %s7 = inlined_call_operand.<no memory space> [shape: f32[1,1], index: 7, kind: input, shape index: {}]
  %s8 = inlined_call_operand.hbm [shape: f32[1,64], index: 8, kind: output, shape index: {}]
  %s9 = sld [smem:[#allocation0]]
  $region42: #{simple_gcn_forward.1} parent=0
    _
  %s11 = ssub.s32 1, %s9
  %s12 = scalar_select 0, %s11, %s9
  %v13 = vstv %s7
  %14 = vst [vmem:[#allocation2] sm:$0x1] %v13
  $region1: #{simple_gcn_forward.1} parent=0
    #allocation3 [shape = 'u8[512]{0}', space=vmem, size = 0x400, scoped, tag = 'output window, operand 0, single buffered']
    #allocation4 [shape = 's32[1]{0}', space=sflag, size = 0x4, scoped, tag = 'scoped memory for simple_gcn_forward.1']
    %15 = vsyncpa [#allocation4], 0
    // Predicated region
    $region2: #{simple_gcn_forward.1} parent=1 // pred_check
      _
    $region3: #{simple_gcn_forward.1} parent=1 // pred_check_branch
      %17 = sbr.rel (0) target = $region5
    $region4: #{simple_gcn_forward.1} parent=1 // pred_region
      _
    $region5: #{simple_gcn_forward.1} parent=1 // pred_fallthru
      _
    // Predicated region
    $region6: #{simple_gcn_forward.1} parent=1 // pred_check
      _
    $region7: #{simple_gcn_forward.1} parent=1 // pred_check_branch
      %19 = sbr.rel (0) target = $region9
    $region8: #{simple_gcn_forward.1} parent=1 // pred_region
      _
    $region9: #{simple_gcn_forward.1} parent=1 // pred_fallthru
      _
    // Predicated region
    $region10: #{simple_gcn_forward.1} parent=1 // pred_check
      _
    $region11: #{simple_gcn_forward.1} parent=1 // pred_check_branch
      %21 = sbr.rel (0) target = $region13
    $region12: #{simple_gcn_forward.1} parent=1 // pred_region
      _
    $region13: #{simple_gcn_forward.1} parent=1 // pred_fallthru
      _
    // Predicated region
    $region14: #{simple_gcn_forward.1} parent=1 // pred_check
      _
    $region15: #{simple_gcn_forward.1} parent=1 // pred_check_branch
      %23 = sbr.rel (0) target = $region17
    $region16: #{simple_gcn_forward.1} parent=1 // pred_region
      _
    $region17: #{simple_gcn_forward.1} parent=1 // pred_fallthru
      _
    // Predicated region
    $region18: #{simple_gcn_forward.1} parent=1 // pred_check
      _
    $region19: #{simple_gcn_forward.1} parent=1 // pred_check_branch
      %25 = sbr.rel (0) target = $region21
    $region20: #{simple_gcn_forward.1} parent=1 // pred_region
      _
    $region21: #{simple_gcn_forward.1} parent=1 // pred_fallthru
      _
    // Predicated region
    $region22: #{simple_gcn_forward.1} parent=1 // pred_check
      _
    $region23: #{simple_gcn_forward.1} parent=1 // pred_check_branch
      %27 = sbr.rel (0) target = $region25
    $region24: #{simple_gcn_forward.1} parent=1 // pred_region
      _
    $region25: #{simple_gcn_forward.1} parent=1 // pred_fallthru
      _
    // Predicated region
    $region26: #{simple_gcn_forward.1} parent=1 // pred_check
      _
    $region27: #{simple_gcn_forward.1} parent=1 // pred_check_branch
      %29 = sbr.rel (0) target = $region29
    $region28: #{simple_gcn_forward.1} parent=1 // pred_region
      _
    $region29: #{simple_gcn_forward.1} parent=1 // pred_fallthru
      _
    // Predicated region
    $region30: #{simple_gcn_forward.1} parent=1 // pred_check
      _
    $region31: #{simple_gcn_forward.1} parent=1 // pred_check_branch
      %31 = sbr.rel (0) target = $region33
    $region32: #{simple_gcn_forward.1} parent=1 // pred_region
      _
    $region33: #{simple_gcn_forward.1} parent=1 // pred_fallthru
      _
    %v32 = vld [vmem:[%s0] sm:$0xff]
    %v33 = vld [vmem:[%s0 + $0x8] sm:$0xff]
    %v34 = vld [vmem:[%s0 + $0x10] sm:$0xff]
    %v35 = vld [vmem:[%s0 + $0x18] sm:$0xff]
    %v36 = vld [vmem:[%s0 + $0x20] sm:$0xff]
    %v37 = vld [vmem:[%s0 + $0x28] sm:$0xff]
    %v38 = vld [vmem:[%s0 + $0x30] sm:$0xff]
    %v39 = vld [vmem:[%s0 + $0x38] sm:$0xff]
    %v40 = vld [vmem:[%s1] sm:$0xff]
    %v41 = vld [vmem:[%s1 + $0x8] sm:$0xff]
    %v42 = vld [vmem:[%s1 + $0x10] sm:$0xff]
    %v43 = vld [vmem:[%s1 + $0x18] sm:$0xff]
    %vm44 = vcmask 523264
    %v46 = vsel %vm44, %v40, 0
    %v49 = vsel %vm44, %v41, 0
    %v52 = vsel %vm44, %v42, 0
    %v55 = vsel %vm44, %v43, 0
    %57 = vmatprep.subr.mxu0 0.0
    %58 = vmatpush1.msra.mxu0 %v32
    %59 = vmatprep.subr.mxu0 0.0
    %60 = vmatpush1.msra.mxu0 %v33
    %61 = vmatprep.subr.mxu0 0.0
    %62 = vmatpush1.msra.mxu0 %v34
    %63 = vmatprep.subr.mxu0 0.0
    %64 = vmatpush1.msra.mxu0 %v35
    %65 = vmatprep.subr.mxu0 0.0
    %66 = vmatpush1.msra.mxu0 %v36
    %67 = vmatprep.subr.mxu0 0.0
    %68 = vmatpush1.msra.mxu0 %v37
    %69 = vmatprep.subr.mxu0 0.0
    %70 = vmatpush1.msra.mxu0 %v38
    %71 = vmatprep.subr.mxu0 0.0
    %72 = vmatpush1.msra.mxu0 %v39
    %73 = vmatprep.subr.mxu0 0.0
    %74 = vmatpush1.msra.mxu0 0.0
    %75 = vmatprep.subr.mxu0 0.0
    %76 = vmatpush1.msra.mxu0 0.0
    %77 = vmatprep.subr.mxu0 0.0
    %78 = vmatpush1.msra.mxu0 0.0
    %79 = vmatprep.subr.mxu0 0.0
    %80 = vmatpush1.msra.mxu0 0.0
    %81 = vmatprep.subr.mxu0 0.0
    %82 = vmatpush1.msra.mxu0 0.0
    %83 = vmatprep.subr.mxu0 0.0
    %84 = vmatpush1.msra.mxu0 0.0
    %85 = vmatprep.subr.mxu0 0.0
    %86 = vmatpush1.msra.mxu0 0.0
    %87 = vmatprep.subr.mxu0 0.0
    %88 = vmatpush1.msra.mxu0 0.0
    %89 = vmatprep.subr.mxu0 0.0
    %90 = vmatpush1.msra.mxu0 0.0
    %91 = vmatprep.subr.mxu0 0.0
    %92 = vmatpush1.msra.mxu0 0.0
    %93 = vmatprep.subr.mxu0 0.0
    %94 = vmatpush1.msra.mxu0 0.0
    %95 = vmatprep.subr.mxu0 0.0
    %96 = vmatpush1.msra.mxu0 0.0
    %97 = vmatprep.subr.mxu0 0.0
    %98 = vmatpush1.msra.mxu0 0.0
    %99 = vmatprep.subr.mxu0 0.0
    %100 = vmatpush1.msra.mxu0 0.0
    %101 = vmatprep.subr.mxu0 0.0
    %102 = vmatpush1.msra.mxu0 0.0
    %103 = vmatprep.subr.mxu0 0.0
    %104 = vmatpush1.msra.mxu0 0.0
    %105 = vmatprep.subr.mxu0 0.0
    %106 = vmatpush1.msra.mxu0 0.0
    %107 = vmatprep.subr.mxu0 0.0
    %108 = vmatpush1.msra.mxu0 0.0
    %109 = vmatprep.subr.mxu0 0.0
    %110 = vmatpush1.msra.mxu0 0.0
    %111 = vmatprep.subr.mxu0 0.0
    %112 = vmatpush1.msra.mxu0 0.0
    %113 = vmatprep.subr.mxu0 0.0
    %114 = vmatpush1.msra.mxu0 0.0
    %115 = vmatprep.subr.mxu0 0.0
    %116 = vmatpush1.msra.mxu0 0.0
    %117 = vmatprep.subr.mxu0 0.0
    %118 = vmatpush1.msra.mxu0 0.0
    %119 = vmatprep.subr.mxu0 0.0
    %120 = vmatpush1.msra.mxu0 0.0
    %121 = vmatprep.mubr.f32.mxu0 0.0
    %122 = vmatmul.mubr.f32.gmra.mrb[0].mxu0 %v46
    %v123 = vpop.f32.mrb[0].mxu0
    %v124 = vadd.f32 0.0, %v123
    %v125 = vpop.f32.mrb[0].mxu0
    %126 = vmatprep.mubr.f32.mxu0 0.0
    %127 = vmatmul.mubr.f32.gmra.mrb[0].mxu0 %v49
    %v128 = vpop.f32.mrb[0].mxu0
    %v129 = vadd.f32 0.0, %v128
    %v130 = vpop.f32.mrb[0].mxu0
    %131 = vmatprep.mubr.f32.mxu0 0.0
    %132 = vmatmul.mubr.f32.gmra.mrb[0].mxu0 %v52
    %v133 = vpop.f32.mrb[0].mxu0
    %v134 = vadd.f32 0.0, %v133
    %v135 = vpop.f32.mrb[0].mxu0
    %136 = vmatprep.mubr.f32.mxu0 0.0
    %137 = vmatmul.mubr.f32.gmra.mrb[0].mxu0 %v55
    %v138 = vpop.f32.mrb[0].mxu0
    %v139 = vadd.f32 0.0, %v138
    %v140 = vpop.f32.mrb[0].mxu0
    %141 = vdwg.mxu0
    %v142 = vld [vmem:[%s2] sm:$0xff]
    %v143 = vld [vmem:[%s2 + $0x8] sm:$0xff]
    %v144 = vld [vmem:[%s2 + $0x10] sm:$0xff]
    %v145 = vld [vmem:[%s2 + $0x18] sm:$0xff]
    %v146 = vld [vmem:[%s3] sm:$0xff]
    %v147 = vld [vmem:[%s3 + $0x8] sm:$0xff]
    %v148 = vld [vmem:[%s3 + $0x10] sm:$0xff]
    %v149 = vld [vmem:[%s3 + $0x18] sm:$0xff]
    %151 = vset.pattern.permute.xlu0 0
    %152 = vperm.xlu0 %151, %v146
    %v153 = vpop.permute.xlu0 %152
    %156 = vset.pattern.permute.xlu0 0
    %157 = vperm.xlu0 %156, %v147
    %v158 = vpop.permute.xlu0 %157
    %161 = vset.pattern.permute.xlu0 0
    %162 = vperm.xlu0 %161, %v148
    %v163 = vpop.permute.xlu0 %162
    %166 = vset.pattern.permute.xlu0 0
    %167 = vperm.xlu0 %166, %v149
    %v168 = vpop.permute.xlu0 %167
    %vm170 = vcmask 261120
    %v172 = vsel %vm170, %v142, 0
    %v175 = vsel %vm170, %v143, 0
    %v178 = vsel %vm170, %v144, 0
    %v181 = vsel %vm170, %v145, 0
    %183 = vmatprep.subr.mxu0 0.0
    %184 = vmatpush1.msra.mxu0 %v124
    %185 = vmatprep.subr.mxu0 0.0
    %186 = vmatpush1.msra.mxu0 %v129
    %187 = vmatprep.subr.mxu0 0.0
    %188 = vmatpush1.msra.mxu0 %v134
    %189 = vmatprep.subr.mxu0 0.0
    %190 = vmatpush1.msra.mxu0 %v139
    %191 = vmatprep.subr.mxu0 0.0
    %192 = vmatpush1.msra.mxu0 0.0
    %193 = vmatprep.subr.mxu0 0.0
    %194 = vmatpush1.msra.mxu0 0.0
    %195 = vmatprep.subr.mxu0 0.0
    %196 = vmatpush1.msra.mxu0 0.0
    %197 = vmatprep.subr.mxu0 0.0
    %198 = vmatpush1.msra.mxu0 0.0
    %199 = vmatprep.subr.mxu0 0.0
    %200 = vmatpush1.msra.mxu0 0.0
    %201 = vmatprep.subr.mxu0 0.0
    %202 = vmatpush1.msra.mxu0 0.0
    %203 = vmatprep.subr.mxu0 0.0
    %204 = vmatpush1.msra.mxu0 0.0
    %205 = vmatprep.subr.mxu0 0.0
    %206 = vmatpush1.msra.mxu0 0.0
    %207 = vmatprep.subr.mxu0 0.0
    %208 = vmatpush1.msra.mxu0 0.0
    %209 = vmatprep.subr.mxu0 0.0
    %210 = vmatpush1.msra.mxu0 0.0
    %211 = vmatprep.subr.mxu0 0.0
    %212 = vmatpush1.msra.mxu0 0.0
    %213 = vmatprep.subr.mxu0 0.0
    %214 = vmatpush1.msra.mxu0 0.0
    %215 = vmatprep.subr.mxu0 0.0
    %216 = vmatpush1.msra.mxu0 0.0
    %217 = vmatprep.subr.mxu0 0.0
    %218 = vmatpush1.msra.mxu0 0.0
    %219 = vmatprep.subr.mxu0 0.0
    %220 = vmatpush1.msra.mxu0 0.0
    %221 = vmatprep.subr.mxu0 0.0
    %222 = vmatpush1.msra.mxu0 0.0
    %223 = vmatprep.subr.mxu0 0.0
    %224 = vmatpush1.msra.mxu0 0.0
    %225 = vmatprep.subr.mxu0 0.0
    %226 = vmatpush1.msra.mxu0 0.0
    %227 = vmatprep.subr.mxu0 0.0
    %228 = vmatpush1.msra.mxu0 0.0
    %229 = vmatprep.subr.mxu0 0.0
    %230 = vmatpush1.msra.mxu0 0.0
    %231 = vmatprep.subr.mxu0 0.0
    %232 = vmatpush1.msra.mxu0 0.0
    %233 = vmatprep.subr.mxu0 0.0
    %234 = vmatpush1.msra.mxu0 0.0
    %235 = vmatprep.subr.mxu0 0.0
    %236 = vmatpush1.msra.mxu0 0.0
    %237 = vmatprep.subr.mxu0 0.0
    %238 = vmatpush1.msra.mxu0 0.0
    %239 = vmatprep.subr.mxu0 0.0
    %240 = vmatpush1.msra.mxu0 0.0
    %241 = vmatprep.subr.mxu0 0.0
    %242 = vmatpush1.msra.mxu0 0.0
    %243 = vmatprep.subr.mxu0 0.0
    %244 = vmatpush1.msra.mxu0 0.0
    %245 = vmatprep.subr.mxu0 0.0
    %246 = vmatpush1.msra.mxu0 0.0
    %247 = vmatprep.mubr.f32.mxu0 0.0
    %248 = vmatmul.mubr.f32.gmra.mrb[0].mxu0 %v172
    %v249 = vpop.f32.mrb[0].mxu0
    %v250 = vadd.f32 %v153, %v249
    %v251 = vpop.f32.mrb[0].mxu0
    %252 = vmatprep.mubr.f32.mxu0 0.0
    %253 = vmatmul.mubr.f32.gmra.mrb[0].mxu0 %v175
    %v254 = vpop.f32.mrb[0].mxu0
    %v255 = vadd.f32 %v158, %v254
    %v256 = vpop.f32.mrb[0].mxu0
    %257 = vmatprep.mubr.f32.mxu0 0.0
    %258 = vmatmul.mubr.f32.gmra.mrb[0].mxu0 %v178
    %v259 = vpop.f32.mrb[0].mxu0
    %v260 = vadd.f32 %v163, %v259
    %v261 = vpop.f32.mrb[0].mxu0
    %262 = vmatprep.mubr.f32.mxu0 0.0
    %263 = vmatmul.mubr.f32.gmra.mrb[0].mxu0 %v181
    %v264 = vpop.f32.mrb[0].mxu0
    %v265 = vadd.f32 %v168, %v264
    %v266 = vpop.f32.mrb[0].mxu0
    %267 = vdwg.mxu0
    %v268 = vmax.f32 %v250, 0.0
    %v269 = vmax.f32 %v255, 0.0
    %v270 = vmax.f32 %v260, 0.0
    %v271 = vmax.f32 %v265, 0.0
    %v273 = vsel %vm44, %v268, 0
    %v276 = vsel %vm44, %v269, 0
    %v279 = vsel %vm44, %v270, 0
    %v282 = vsel %vm44, %v271, 0
    %284 = vmatprep.subr.mxu0 0.0
    %285 = vmatpush1.msra.mxu0 %v32
    %286 = vmatprep.subr.mxu0 0.0
    %287 = vmatpush1.msra.mxu0 %v33
    %288 = vmatprep.subr.mxu0 0.0
    %289 = vmatpush1.msra.mxu0 %v34
    %290 = vmatprep.subr.mxu0 0.0
    %291 = vmatpush1.msra.mxu0 %v35
    %292 = vmatprep.subr.mxu0 0.0
    %293 = vmatpush1.msra.mxu0 %v36
    %294 = vmatprep.subr.mxu0 0.0
    %295 = vmatpush1.msra.mxu0 %v37
    %296 = vmatprep.subr.mxu0 0.0
    %297 = vmatpush1.msra.mxu0 %v38
    %298 = vmatprep.subr.mxu0 0.0
    %299 = vmatpush1.msra.mxu0 %v39
    %300 = vmatprep.subr.mxu0 0.0
    %301 = vmatpush1.msra.mxu0 0.0
    %302 = vmatprep.subr.mxu0 0.0
    %303 = vmatpush1.msra.mxu0 0.0
    %304 = vmatprep.subr.mxu0 0.0
    %305 = vmatpush1.msra.mxu0 0.0
    %306 = vmatprep.subr.mxu0 0.0
    %307 = vmatpush1.msra.mxu0 0.0
    %308 = vmatprep.subr.mxu0 0.0
    %309 = vmatpush1.msra.mxu0 0.0
    %310 = vmatprep.subr.mxu0 0.0
    %311 = vmatpush1.msra.mxu0 0.0
    %312 = vmatprep.subr.mxu0 0.0
    %313 = vmatpush1.msra.mxu0 0.0
    %314 = vmatprep.subr.mxu0 0.0
    %315 = vmatpush1.msra.mxu0 0.0
    %316 = vmatprep.subr.mxu0 0.0
    %317 = vmatpush1.msra.mxu0 0.0
    %318 = vmatprep.subr.mxu0 0.0
    %319 = vmatpush1.msra.mxu0 0.0
    %320 = vmatprep.subr.mxu0 0.0
    %321 = vmatpush1.msra.mxu0 0.0
    %322 = vmatprep.subr.mxu0 0.0
    %323 = vmatpush1.msra.mxu0 0.0
    %324 = vmatprep.subr.mxu0 0.0
    %325 = vmatpush1.msra.mxu0 0.0
    %326 = vmatprep.subr.mxu0 0.0
    %327 = vmatpush1.msra.mxu0 0.0
    %328 = vmatprep.subr.mxu0 0.0
    %329 = vmatpush1.msra.mxu0 0.0
    %330 = vmatprep.subr.mxu0 0.0
    %331 = vmatpush1.msra.mxu0 0.0
    %332 = vmatprep.subr.mxu0 0.0
    %333 = vmatpush1.msra.mxu0 0.0
    %334 = vmatprep.subr.mxu0 0.0
    %335 = vmatpush1.msra.mxu0 0.0
    %336 = vmatprep.subr.mxu0 0.0
    %337 = vmatpush1.msra.mxu0 0.0
    %338 = vmatprep.subr.mxu0 0.0
    %339 = vmatpush1.msra.mxu0 0.0
    %340 = vmatprep.subr.mxu0 0.0
    %341 = vmatpush1.msra.mxu0 0.0
    %342 = vmatprep.subr.mxu0 0.0
    %343 = vmatpush1.msra.mxu0 0.0
    %344 = vmatprep.subr.mxu0 0.0
    %345 = vmatpush1.msra.mxu0 0.0
    %346 = vmatprep.subr.mxu0 0.0
    %347 = vmatpush1.msra.mxu0 0.0
    %348 = vmatprep.mubr.f32.mxu0 0.0
    %349 = vmatmul.mubr.f32.gmra.mrb[0].mxu0 %v273
    %v350 = vpop.f32.mrb[0].mxu0
    %v351 = vadd.f32 0.0, %v350
    %v352 = vpop.f32.mrb[0].mxu0
    %353 = vmatprep.mubr.f32.mxu0 0.0
    %354 = vmatmul.mubr.f32.gmra.mrb[0].mxu0 %v276
    %v355 = vpop.f32.mrb[0].mxu0
    %v356 = vadd.f32 0.0, %v355
    %v357 = vpop.f32.mrb[0].mxu0
    %358 = vmatprep.mubr.f32.mxu0 0.0
    %359 = vmatmul.mubr.f32.gmra.mrb[0].mxu0 %v279
    %v360 = vpop.f32.mrb[0].mxu0
    %v361 = vadd.f32 0.0, %v360
    %v362 = vpop.f32.mrb[0].mxu0
    %363 = vmatprep.mubr.f32.mxu0 0.0
    %364 = vmatmul.mubr.f32.gmra.mrb[0].mxu0 %v282
    %v365 = vpop.f32.mrb[0].mxu0
    %v366 = vadd.f32 0.0, %v365
    %v367 = vpop.f32.mrb[0].mxu0
    %368 = vdwg.mxu0
    %v369 = vld [vmem:[%s4] sm:$0xff]
    %v370 = vld [vmem:[%s4 + $0x8] sm:$0xff]
    %v371 = vld [vmem:[%s4 + $0x10] sm:$0xff]
    %v372 = vld [vmem:[%s4 + $0x18] sm:$0xff]
    %v373 = vld [vmem:[%s5] sm:$0xff]
    %v374 = vld [vmem:[%s5 + $0x8] sm:$0xff]
    %v375 = vld [vmem:[%s5 + $0x10] sm:$0xff]
    %v376 = vld [vmem:[%s5 + $0x18] sm:$0xff]
    %378 = vset.pattern.permute.xlu0 0
    %379 = vperm.xlu0 %378, %v373
    %v380 = vpop.permute.xlu0 %379
    %383 = vset.pattern.permute.xlu0 0
    %384 = vperm.xlu0 %383, %v374
    %v385 = vpop.permute.xlu0 %384
    %388 = vset.pattern.permute.xlu0 0
    %389 = vperm.xlu0 %388, %v375
    %v390 = vpop.permute.xlu0 %389
    %393 = vset.pattern.permute.xlu0 0
    %394 = vperm.xlu0 %393, %v376
    %v395 = vpop.permute.xlu0 %394
    %v398 = vsel %vm170, %v369, 0
    %v401 = vsel %vm170, %v370, 0
    %v404 = vsel %vm170, %v371, 0
    %v407 = vsel %vm170, %v372, 0
    %409 = vmatprep.subr.mxu0 0.0
    %410 = vmatpush1.msra.mxu0 %v351
    %411 = vmatprep.subr.mxu0 0.0
    %412 = vmatpush1.msra.mxu0 %v356
    %413 = vmatprep.subr.mxu0 0.0
    %414 = vmatpush1.msra.mxu0 %v361
    %415 = vmatprep.subr.mxu0 0.0
    %416 = vmatpush1.msra.mxu0 %v366
    %417 = vmatprep.subr.mxu0 0.0
    %418 = vmatpush1.msra.mxu0 0.0
    %419 = vmatprep.subr.mxu0 0.0
    %420 = vmatpush1.msra.mxu0 0.0
    %421 = vmatprep.subr.mxu0 0.0
    %422 = vmatpush1.msra.mxu0 0.0
    %423 = vmatprep.subr.mxu0 0.0
    %424 = vmatpush1.msra.mxu0 0.0
    %425 = vmatprep.subr.mxu0 0.0
    %426 = vmatpush1.msra.mxu0 0.0
    %427 = vmatprep.subr.mxu0 0.0
    %428 = vmatpush1.msra.mxu0 0.0
    %429 = vmatprep.subr.mxu0 0.0
    %430 = vmatpush1.msra.mxu0 0.0
    %431 = vmatprep.subr.mxu0 0.0
    %432 = vmatpush1.msra.mxu0 0.0
    %433 = vmatprep.subr.mxu0 0.0
    %434 = vmatpush1.msra.mxu0 0.0
    %435 = vmatprep.subr.mxu0 0.0
    %436 = vmatpush1.msra.mxu0 0.0
    %437 = vmatprep.subr.mxu0 0.0
    %438 = vmatpush1.msra.mxu0 0.0
    %439 = vmatprep.subr.mxu0 0.0
    %440 = vmatpush1.msra.mxu0 0.0
    %441 = vmatprep.subr.mxu0 0.0
    %442 = vmatpush1.msra.mxu0 0.0
    %443 = vmatprep.subr.mxu0 0.0
    %444 = vmatpush1.msra.mxu0 0.0
    %445 = vmatprep.subr.mxu0 0.0
    %446 = vmatpush1.msra.mxu0 0.0
    %447 = vmatprep.subr.mxu0 0.0
    %448 = vmatpush1.msra.mxu0 0.0
    %449 = vmatprep.subr.mxu0 0.0
    %450 = vmatpush1.msra.mxu0 0.0
    %451 = vmatprep.subr.mxu0 0.0
    %452 = vmatpush1.msra.mxu0 0.0
    %453 = vmatprep.subr.mxu0 0.0
    %454 = vmatpush1.msra.mxu0 0.0
    %455 = vmatprep.subr.mxu0 0.0
    %456 = vmatpush1.msra.mxu0 0.0
    %457 = vmatprep.subr.mxu0 0.0
    %458 = vmatpush1.msra.mxu0 0.0
    %459 = vmatprep.subr.mxu0 0.0
    %460 = vmatpush1.msra.mxu0 0.0
    %461 = vmatprep.subr.mxu0 0.0
    %462 = vmatpush1.msra.mxu0 0.0
    %463 = vmatprep.subr.mxu0 0.0
    %464 = vmatpush1.msra.mxu0 0.0
    %465 = vmatprep.subr.mxu0 0.0
    %466 = vmatpush1.msra.mxu0 0.0
    %467 = vmatprep.subr.mxu0 0.0
    %468 = vmatpush1.msra.mxu0 0.0
    %469 = vmatprep.subr.mxu0 0.0
    %470 = vmatpush1.msra.mxu0 0.0
    %471 = vmatprep.subr.mxu0 0.0
    %472 = vmatpush1.msra.mxu0 0.0
    %473 = vmatprep.mubr.f32.mxu0 0.0
    %474 = vmatmul.mubr.f32.gmra.mrb[0].mxu0 %v398
    %v475 = vpop.f32.mrb[0].mxu0
    %v476 = vadd.f32 %v380, %v475
    %v477 = vpop.f32.mrb[0].mxu0
    %478 = vmatprep.mubr.f32.mxu0 0.0
    %479 = vmatmul.mubr.f32.gmra.mrb[0].mxu0 %v401
    %v480 = vpop.f32.mrb[0].mxu0
    %v481 = vadd.f32 %v385, %v480
    %v482 = vpop.f32.mrb[0].mxu0
    %483 = vmatprep.mubr.f32.mxu0 0.0
    %484 = vmatmul.mubr.f32.gmra.mrb[0].mxu0 %v404
    %v485 = vpop.f32.mrb[0].mxu0
    %v486 = vadd.f32 %v390, %v485
    %v487 = vpop.f32.mrb[0].mxu0
    %488 = vmatprep.mubr.f32.mxu0 0.0
    %489 = vmatmul.mubr.f32.gmra.mrb[0].mxu0 %v407
    %v490 = vpop.f32.mrb[0].mxu0
    %v491 = vadd.f32 %v395, %v490
    %v492 = vpop.f32.mrb[0].mxu0
    %493 = vdwg.mxu0
    %v494 = vmax.f32 %v476, 0.0
    %v495 = vmax.f32 %v481, 0.0
    %v496 = vmax.f32 %v486, 0.0
    %v497 = vmax.f32 %v491, 0.0
    %v498 = vld [vmem:[%s6] sm:$0x1]
    %v500 = vsel %vm170, %v498, 0
    %502 = vmatprep.subr.mxu0 0.0
    %503 = vmatpush1.msra.mxu0 %v494
    %504 = vmatprep.subr.mxu0 0.0
    %505 = vmatpush1.msra.mxu0 %v495
    %506 = vmatprep.subr.mxu0 0.0
    %507 = vmatpush1.msra.mxu0 %v496
    %508 = vmatprep.subr.mxu0 0.0
    %509 = vmatpush1.msra.mxu0 %v497
    %510 = vmatprep.subr.mxu0 0.0
    %511 = vmatpush1.msra.mxu0 0.0
    %512 = vmatprep.subr.mxu0 0.0
    %513 = vmatpush1.msra.mxu0 0.0
    %514 = vmatprep.subr.mxu0 0.0
    %515 = vmatpush1.msra.mxu0 0.0
    %516 = vmatprep.subr.mxu0 0.0
    %517 = vmatpush1.msra.mxu0 0.0
    %518 = vmatprep.subr.mxu0 0.0
    %519 = vmatpush1.msra.mxu0 0.0
    %520 = vmatprep.subr.mxu0 0.0
    %521 = vmatpush1.msra.mxu0 0.0
    %522 = vmatprep.subr.mxu0 0.0
    %523 = vmatpush1.msra.mxu0 0.0
    %524 = vmatprep.subr.mxu0 0.0
    %525 = vmatpush1.msra.mxu0 0.0
    %526 = vmatprep.subr.mxu0 0.0
    %527 = vmatpush1.msra.mxu0 0.0
    %528 = vmatprep.subr.mxu0 0.0
    %529 = vmatpush1.msra.mxu0 0.0
    %530 = vmatprep.subr.mxu0 0.0
    %531 = vmatpush1.msra.mxu0 0.0
    %532 = vmatprep.subr.mxu0 0.0
    %533 = vmatpush1.msra.mxu0 0.0
    %534 = vmatprep.subr.mxu0 0.0
    %535 = vmatpush1.msra.mxu0 0.0
    %536 = vmatprep.subr.mxu0 0.0
    %537 = vmatpush1.msra.mxu0 0.0
    %538 = vmatprep.subr.mxu0 0.0
    %539 = vmatpush1.msra.mxu0 0.0
    %540 = vmatprep.subr.mxu0 0.0
    %541 = vmatpush1.msra.mxu0 0.0
    %542 = vmatprep.subr.mxu0 0.0
    %543 = vmatpush1.msra.mxu0 0.0
    %544 = vmatprep.subr.mxu0 0.0
    %545 = vmatpush1.msra.mxu0 0.0
    %546 = vmatprep.subr.mxu0 0.0
    %547 = vmatpush1.msra.mxu0 0.0
    %548 = vmatprep.subr.mxu0 0.0
    %549 = vmatpush1.msra.mxu0 0.0
    %550 = vmatprep.subr.mxu0 0.0
    %551 = vmatpush1.msra.mxu0 0.0
    %552 = vmatprep.subr.mxu0 0.0
    %553 = vmatpush1.msra.mxu0 0.0
    %554 = vmatprep.subr.mxu0 0.0
    %555 = vmatpush1.msra.mxu0 0.0
    %556 = vmatprep.subr.mxu0 0.0
    %557 = vmatpush1.msra.mxu0 0.0
    %558 = vmatprep.subr.mxu0 0.0
    %559 = vmatpush1.msra.mxu0 0.0
    %560 = vmatprep.subr.mxu0 0.0
    %561 = vmatpush1.msra.mxu0 0.0
    %562 = vmatprep.subr.mxu0 0.0
    %563 = vmatpush1.msra.mxu0 0.0
    %564 = vmatprep.subr.mxu0 0.0
    %565 = vmatpush1.msra.mxu0 0.0
    %566 = vmatprep.mubr.f32.mxu0 0.0
    %567 = vmatmul.mubr.f32.gmra.mrb[0].mxu0 %v500
    %v568 = vpop.f32.mrb[0].mxu0
    %v569 = vadd.f32 0.0, %v568
    %v570 = vpop.f32.mrb[0].mxu0
    %571 = vdwg.mxu0
    %v572 = vld [vmem:[#allocation2] sm:$0x1]
    %574 = vset.pattern.permute.xlu0 0
    %575 = vperm.xlu0 %574, %v572
    %v576 = vpop.permute.xlu0 %575
    %v578 = vlaneseq
    %v579 = vshrl.u32 %v578, 7
    %v580 = vsub.s32 0, %v579
    %v581 = vrot.slane %v576, %v580
    %v583 = vsel %vm44, %v569, 0
    %585 = vmatprep.subr.mxu0 0.0
    %586 = vmatpush1.msra.mxu0 %v32
    %587 = vmatprep.subr.mxu0 0.0
    %588 = vmatpush1.msra.mxu0 %v33
    %589 = vmatprep.subr.mxu0 0.0
    %590 = vmatpush1.msra.mxu0 %v34
    %591 = vmatprep.subr.mxu0 0.0
    %592 = vmatpush1.msra.mxu0 %v35
    %593 = vmatprep.subr.mxu0 0.0
    %594 = vmatpush1.msra.mxu0 %v36
    %595 = vmatprep.subr.mxu0 0.0
    %596 = vmatpush1.msra.mxu0 %v37
    %597 = vmatprep.subr.mxu0 0.0
    %598 = vmatpush1.msra.mxu0 %v38
    %599 = vmatprep.subr.mxu0 0.0
    %600 = vmatpush1.msra.mxu0 %v39
    %601 = vmatprep.subr.mxu0 0.0
    %602 = vmatpush1.msra.mxu0 0.0
    %603 = vmatprep.subr.mxu0 0.0
    %604 = vmatpush1.msra.mxu0 0.0
    %605 = vmatprep.subr.mxu0 0.0
    %606 = vmatpush1.msra.mxu0 0.0
    %607 = vmatprep.subr.mxu0 0.0
    %608 = vmatpush1.msra.mxu0 0.0
    %609 = vmatprep.subr.mxu0 0.0
    %610 = vmatpush1.msra.mxu0 0.0
    %611 = vmatprep.subr.mxu0 0.0
    %612 = vmatpush1.msra.mxu0 0.0
    %613 = vmatprep.subr.mxu0 0.0
    %614 = vmatpush1.msra.mxu0 0.0
    %615 = vmatprep.subr.mxu0 0.0
    %616 = vmatpush1.msra.mxu0 0.0
    %617 = vmatprep.subr.mxu0 0.0
    %618 = vmatpush1.msra.mxu0 0.0
    %619 = vmatprep.subr.mxu0 0.0
    %620 = vmatpush1.msra.mxu0 0.0
    %621 = vmatprep.subr.mxu0 0.0
    %622 = vmatpush1.msra.mxu0 0.0
    %623 = vmatprep.subr.mxu0 0.0
    %624 = vmatpush1.msra.mxu0 0.0
    %625 = vmatprep.subr.mxu0 0.0
    %626 = vmatpush1.msra.mxu0 0.0
    %627 = vmatprep.subr.mxu0 0.0
    %628 = vmatpush1.msra.mxu0 0.0
    %629 = vmatprep.subr.mxu0 0.0
    %630 = vmatpush1.msra.mxu0 0.0
    %631 = vmatprep.subr.mxu0 0.0
    %632 = vmatpush1.msra.mxu0 0.0
    %633 = vmatprep.subr.mxu0 0.0
    %634 = vmatpush1.msra.mxu0 0.0
    %635 = vmatprep.subr.mxu0 0.0
    %636 = vmatpush1.msra.mxu0 0.0
    %637 = vmatprep.subr.mxu0 0.0
    %638 = vmatpush1.msra.mxu0 0.0
    %639 = vmatprep.subr.mxu0 0.0
    %640 = vmatpush1.msra.mxu0 0.0
    %641 = vmatprep.subr.mxu0 0.0
    %642 = vmatpush1.msra.mxu0 0.0
    %643 = vmatprep.subr.mxu0 0.0
    %644 = vmatpush1.msra.mxu0 0.0
    %645 = vmatprep.subr.mxu0 0.0
    %646 = vmatpush1.msra.mxu0 0.0
    %647 = vmatprep.subr.mxu0 0.0
    %648 = vmatpush1.msra.mxu0 0.0
    %649 = vmatprep.mubr.f32.mxu0 0.0
    %650 = vmatmul.mubr.f32.gmra.mrb[0].mxu0 %v583
    %v651 = vpop.f32.mrb[0].mxu0
    %v652 = vadd.f32 %v581, %v651
    %v653 = vpop.f32.mrb[0].mxu0
    %654 = vdwg.mxu0
    %vm655 = vcmask 516096
    %656 = vst.msk [vmem:[#allocation3] sm:$0x1] %vm655, %v652
    // Predicated region
    $region34: #{simple_gcn_forward.1} parent=1 // pred_check
      _
    $region35: #{simple_gcn_forward.1} parent=1 // pred_check_branch
      %658 = sbr.rel (0) target = $region37
    $region36: #{simple_gcn_forward.1} parent=1 // pred_region
      %s660 = ssub.s32 16, 16
      %661 = vsyncadd [#allocation4], %s660
      %s663 = sshll.u32 [#allocation3], 4
      %s664 = int_to_ptr.vmem [resolvable:$true] %s663
      %666 = dma.vmem_to_hbm [thread:$0]  %s664, 16, %s8, [#allocation4]
    $region37: #{simple_gcn_forward.1} parent=1 // pred_fallthru
      _
    // Predicated region
    $region38: #{simple_gcn_forward.1} parent=1 // pred_check
      _
    $region39: #{simple_gcn_forward.1} parent=1 // pred_check_branch
      %668 = sbr.rel (0) target = $region41
    $region40: #{simple_gcn_forward.1} parent=1 // pred_region
      %669 = dma.done [#allocation4], 16
    $region41: #{simple_gcn_forward.1} parent=1 // pred_fallthru
      _
    %670 = vsyncpa [#allocation4], 1

</llo_original>
